<compile_context>
chip_gen: v7x
topology: tpu7x:2x2x1
jax: 0.10.0
libtpu: 0.0.40
codegen_flags: <defaults>
</compile_context>

<pallas_src>
import functools

import jax
import jax.numpy as jnp
from jax.experimental import pallas as pl
from jax.experimental.pallas import tpu as pltpu

_NEG = -1e30  # pad value for padded class columns of y


def _round_up(v, m):
    return ((v + m - 1) // m) * m


def _pick_block_sizes(B, D, C, block_b, block_c):
    if block_b is None:
        if B <= 8:
            block_b = 8
        else:
            # >=2 batch tiles (batch is the only "parallel" axis -> v7x megacore),
            # capped at 256 rows to feed the MXU.
            block_b = min(256, _round_up(-(-B // 2), 8))
    if block_c is None:
        block_c = min(512, _round_up(C, 128))

    def vmem_bytes(bb, bc):
        per_step = (bb * D * 2          # x tile (bf16)
                    + bb * 4            # ||x||^2
                    + bb * bc * 4       # y tile (f32)
                    + bb * 4            # labels
                    + bc * 4            # ||c||^2
                    + D * bc * 2)       # centers^T tile (bf16)
        out_bytes = 2 * 8 * 128 * 4
        scratch = 4 * bb * 4
        return 2 * (per_step + out_bytes) + scratch   # double-buffered

    # Keep the double-buffered working set under ~44 MiB so it also fits v7x's
    # 64 MiB VMEM; v5e/v6e (128 MiB) are never the binding constraint here.
    budget = 44 * 1024 * 1024
    while vmem_bytes(block_b, block_c) > budget and block_c > 128:
        block_c = max(128, _round_up(block_c // 2, 128))
    while vmem_bytes(block_b, block_c) > budget and block_b > 8:
        block_b = max(8, _round_up(block_b // 2, 8))
    return block_b, block_c, vmem_bytes(block_b, block_c)


def _center_loss_kernel(batch_real, inv_temp,
                        x_ref, xsq_ref, y_ref, labels_ref, csq_ref, ct_ref,
                        center_out_ref, cls_out_ref,
                        m_sc, l_sc, t_sc, cen_sc):
    c_idx = pl.program_id(1)
    nc = pl.num_programs(1)
    TB, TC = y_ref.shape

    # ---- per-batch-tile init (class axis is innermost / reduction) --------
    @pl.when(c_idx == 0)
    def _init():
        m_sc[...] = jnp.full_like(m_sc, -jnp.inf)
        l_sc[...] = jnp.zeros_like(l_sc)
        t_sc[...] = jnp.zeros_like(t_sc)
        cen_sc[...] = jnp.zeros_like(cen_sc)

    labels = labels_ref[...]                                      # (TB, 1) int32
    cls_ids = c_idx * TC + jax.lax.broadcasted_iota(jnp.int32, (TB, TC), 1)
    onehot = labels == cls_ids                                    # (TB, TC) bool
    onehot_f = onehot.astype(jnp.float32)

    # ---- center loss: tiled squared-distance matrix on the MXU ------------
    # bf16 operands, f32 accumulation; hoisted norms streamed as inputs.
    xcT = jnp.dot(x_ref[...], ct_ref[...], preferred_element_type=jnp.float32)
    distmat = xsq_ref[...] + csq_ref[...] - 2.0 * xcT             # (TB, TC) f32
    cen_sc[...] += jnp.sum(jnp.clip(distmat * onehot_f, 1e-12, 1.0e12),
                           axis=1, keepdims=True)

    # ---- cross entropy: online softmax across class tiles -----------------
    logits = y_ref[...] * inv_temp
    tile_max = jnp.max(logits, axis=1, keepdims=True)
    m_new = jnp.maximum(m_sc[...], tile_max)
    alpha = jnp.exp(m_sc[...] - m_new)
    l_sc[...] = alpha * l_sc[...] + jnp.sum(jnp.exp(logits - m_new),
                                            axis=1, keepdims=True)
    m_sc[...] = m_new
    t_sc[...] += jnp.sum(jnp.where(onehot, logits, 0.0), axis=1, keepdims=True)

    # ---- finalize: write per-batch-tile partial sums once ------------------
    @pl.when(c_idx == nc - 1)
    def _fin():
        inv_b = 1.0 / float(batch_real)
        row_valid = (labels >= 0).astype(jnp.float32)             # drop padded rows
        nll = (m_sc[...] + jnp.log(l_sc[...])) - t_sc[...]        # (TB, 1)
        cls_partial = jnp.sum(nll * row_valid) * inv_b
        cen_partial = jnp.sum(cen_sc[...] * row_valid) * inv_b
        # Broadcast the scalar over a full (8,128) tile -> single unmasked
        # lane-dense store; the wrapper reads element [b, 0, 0] of each block.
        center_out_ref[...] = jnp.broadcast_to(cen_partial, center_out_ref.shape)
        cls_out_ref[...] = jnp.broadcast_to(cls_partial, cls_out_ref.shape)


def center_loss_forward(x, y, labels, centers, temp, *, block_b=None, block_c=None):
    """Returns (center_loss, cls_loss) as f32 scalars."""
    B, D = x.shape
    C, D2 = centers.shape
    assert D == D2 and y.shape == (B, C)

    x = x.astype(jnp.float32)
    y = y.astype(jnp.float32)
    centers = centers.astype(jnp.float32)
    labels = labels.astype(jnp.int32)

    block_b, block_c, vmem_est = _pick_block_sizes(B, D, C, block_b, block_c)
    assert block_b % 8 == 0 and block_c % 128 == 0

    b_pad = _round_up(B, block_b)
    c_pad = _round_up(C, block_c)

    # Padded rows: zeros + label -1 (never match; dropped at finalize).
    # Padded class columns of y: _NEG (never win softmax, never picked).
    if b_pad != B:
        x = jnp.pad(x, ((0, b_pad - B), (0, 0)))
        y = jnp.pad(y, ((0, b_pad - B), (0, 0)))
        labels = jnp.pad(labels, (0, b_pad - B), constant_values=-1)
    if c_pad != C:
        y = jnp.pad(y, ((0, 0), (0, c_pad - C)), constant_values=_NEG)
        centers = jnp.pad(centers, ((0, c_pad - C), (0, 0)))

    # Hoisted squared norms (f32), computed once in the wrapper.
    xsq = jnp.sum(x * x, axis=1, keepdims=True)                   # (b_pad, 1)
    csq = jnp.sum(centers * centers, axis=1).reshape(1, c_pad)    # (1, c_pad)

    # MXU operands in bf16; accumulation / epilogue stay f32.
    x_bf = x.astype(jnp.bfloat16)
    centers_t = jnp.transpose(centers).astype(jnp.bfloat16)       # (D, c_pad)
    labels2d = labels.reshape(b_pad, 1)

    nb = b_pad // block_b
    nc = c_pad // block_c

    kernel = functools.partial(_center_loss_kernel, B, float(1.0 / temp))

    in_specs = [
        pl.BlockSpec((block_b, D), lambda b, c: (b, 0)),          # x (bf16)
        pl.BlockSpec((block_b, 1), lambda b, c: (b, 0)),          # ||x||^2
        pl.BlockSpec((block_b, block_c), lambda b, c: (b, c)),    # y logits (f32)
        pl.BlockSpec((block_b, 1), lambda b, c: (b, 0)),          # labels
        pl.BlockSpec((1, block_c), lambda b, c: (0, c)),          # ||c||^2
        # TODO(synk): if profiling shows exposed DMA on the class loop, add
        # pipeline_mode=pl.Buffered(3) on centers_t / y (costs VMEM on v7x).
        pl.BlockSpec((D, block_c), lambda b, c: (0, c)),          # centers^T (bf16)
    ]
    out_specs = (
        pl.BlockSpec((1, 8, 128), lambda b, c: (b, 0, 0)),        # center partials
        pl.BlockSpec((1, 8, 128), lambda b, c: (b, 0, 0)),        # cls partials
    )
    out_shape = (
        jax.ShapeDtypeStruct((nb, 8, 128), jnp.float32),
        jax.ShapeDtypeStruct((nb, 8, 128), jnp.float32),
    )
    scratch_shapes = [
        pltpu.VMEM((block_b, 1), jnp.float32),   # running max (online softmax)
        pltpu.VMEM((block_b, 1), jnp.float32),   # running sum-exp
        pltpu.VMEM((block_b, 1), jnp.float32),   # picked logit (label column)
        pltpu.VMEM((block_b, 1), jnp.float32),   # per-row center-loss sum
    ]
    cost = pl.CostEstimate(
        flops=int(2 * b_pad * c_pad * D + 12 * b_pad * c_pad),
        transcendentals=int(b_pad * c_pad + 2 * b_pad * nc + b_pad),
        bytes_accessed=int(
            b_pad * D * 2 + b_pad * 4 + b_pad * c_pad * 4 + b_pad * 4
            + nb * (c_pad * D * 2 + c_pad * 4)        # centers^T / csq re-streamed per batch tile
            + 2 * nb * 8 * 128 * 4),                  # outputs
    )
    vmem_limit = int(min(96 * 1024 * 1024,
                         max(32 * 1024 * 1024, vmem_est + 16 * 1024 * 1024)))

    center_p, cls_p = pl.pallas_call(
        kernel,
        grid=(nb, nc),
        in_specs=in_specs,
        out_specs=out_specs,
        out_shape=out_shape,
        scratch_shapes=scratch_shapes,
        compiler_params=pltpu.CompilerParams(
            dimension_semantics=("parallel", "arbitrary"),
            vmem_limit_bytes=vmem_limit,
        ),
        cost_estimate=cost,
    )(x_bf, xsq, y, labels2d, csq, centers_t)

    # torch clamps over all B*C entries; each padded class column contributed
    # exactly clamp(0) = 1e-12 per valid row -> remove that known constant.
    center_loss = jnp.sum(center_p[:, 0, 0]) - float(c_pad - C) * 1e-12
    cls_loss = jnp.sum(cls_p[:, 0, 0])
    return center_loss, cls_loss


def _reference(x, y, labels, centers, temp):
    """Pure-JAX f32 reference with the same semantics."""
    B = x.shape[0]
    C = centers.shape[0]
    xsq = jnp.sum(x * x, axis=1, keepdims=True)
    csq = jnp.sum(centers * centers, axis=1, keepdims=True)
    distmat = xsq + csq.T - 2.0 * (x @ centers.T)
    mask = (labels[:, None] == jnp.arange(C)[None, :]).astype(jnp.float32)
    ref_center = jnp.sum(jnp.clip(distmat * mask, 1e-12, 1e12)) / B
    logp = jax.nn.log_softmax(y / temp, axis=1)
    ref_cls = -jnp.mean(jnp.take_along_axis(logp, labels[:, None], axis=1))
    return ref_center, ref_cls


if __name__ == "__main__":
    temp = 2.0
    # (batch, num_classes, feat_dim, block_b, block_c)
    configs = [
        (16, 512, 128, None, None),   # auto tiles: grid (2, 1)
        (16, 512, 128, 8, 128),       # forced small tiles: exercises class reduction (2, 4)
        (10, 200, 64, None, None),    # batch + class padding, auto tiles
        (10, 200, 64, 8, 128),        # padding + multi class tile: grid (2, 2)
    ]
    for batch, num_classes, feat_dim, bb, bc in configs:
        key = jax.random.PRNGKey(0)
        k_centers, k_x, k_y, k_lbl = jax.random.split(key, 4)
        centers = jax.random.normal(k_centers, (num_classes, feat_dim), jnp.float32)
        x = jax.random.normal(k_x, (batch, feat_dim), jnp.float32)
        y = jax.random.normal(k_y, (batch, num_classes), jnp.float32)
        labels = jax.random.randint(k_lbl, (batch,), 0, num_classes, jnp.int32)

        center_loss, cls_loss = center_loss_forward(
            x, y, labels, centers, temp, block_b=bb, block_c=bc)
        jax.block_until_ready((center_loss, cls_loss))

        ref_center, ref_cls = _reference(x, y, labels, centers, temp)
        # bf16 matmul operands (f32 accumulation) -> slightly looser tolerance.
        assert jnp.allclose(center_loss, ref_center, rtol=2e-3, atol=2e-3), (
            (batch, num_classes, feat_dim), float(center_loss), float(ref_center))
        assert jnp.allclose(cls_loss, ref_cls, rtol=2e-3, atol=2e-3), (
            (batch, num_classes, feat_dim), float(cls_loss), float(ref_cls))

    print("KERNEL_OK")
</pallas_src>

<mosaic_0001>
module attributes {stable_mosaic.version = 11 : i64} {
  func.func @_center_loss_kernel(%arg0: i32, %arg1: i32, %arg2: memref<8x128xbf16, #tpu.memory_space<vmem>>, %arg3: memref<8x1xf32, #tpu.memory_space<vmem>>, %arg4: memref<8x512xf32, #tpu.memory_space<vmem>>, %arg5: memref<8x1xi32, #tpu.memory_space<vmem>>, %arg6: memref<1x512xf32, #tpu.memory_space<vmem>>, %arg7: memref<128x512xbf16, #tpu.memory_space<vmem>>, %arg8: memref<1x8x128xf32, #tpu.memory_space<vmem>>, %arg9: memref<1x8x128xf32, #tpu.memory_space<vmem>>, %arg10: memref<8x1xf32, #tpu.memory_space<vmem>>, %arg11: memref<8x1xf32, #tpu.memory_space<vmem>>, %arg12: memref<8x1xf32, #tpu.memory_space<vmem>>, %arg13: memref<8x1xf32, #tpu.memory_space<vmem>>) attributes {dimension_semantics = [#tpu.dimension_semantics<parallel>, #tpu.dimension_semantics<arbitrary>], iteration_bounds = array<i64: 2, 1>, scalar_prefetch = 0 : i64, scratch_operands = 4 : i64, tpu.core_type = #tpu.core_type<tc>, window_params = [{transform_indices = @transform_0, window_bounds = array<i64: 8, 128>}, {transform_indices = @transform_1, window_bounds = array<i64: 8, 1>}, {transform_indices = @transform_2, window_bounds = array<i64: 8, 512>}, {transform_indices = @transform_3, window_bounds = array<i64: 8, 1>}, {transform_indices = @transform_4, window_bounds = array<i64: 1, 512>}, {transform_indices = @transform_5, window_bounds = array<i64: 128, 512>}, {transform_indices = @transform_6, window_bounds = array<i64: 1, 8, 128>}, {transform_indices = @transform_7, window_bounds = array<i64: 1, 8, 128>}]} {
    %c0_i32 = arith.constant 0 : i32
    %0 = arith.cmpi eq, %arg1, %c0_i32 : i32
    %1 = arith.extui %0 : i1 to i32
    %c0_i32_0 = arith.constant 0 : i32
    %2 = arith.cmpi ne, %1, %c0_i32_0 : i32
    scf.if %2 {
      %cst_41 = arith.constant 0xFF800000 : f32
      %63 = vector.broadcast %cst_41 : f32 to vector<8x1xf32>
      %c0_42 = arith.constant 0 : index
      %c0_43 = arith.constant 0 : index
      %64 = vector.load %arg10[%c0_42, %c0_43] : memref<8x1xf32, #tpu.memory_space<vmem>>, vector<8x1xf32>
      tpu.vector_store %arg10[%c0_42, %c0_43], %63 {strides = array<i32>} : memref<8x1xf32, #tpu.memory_space<vmem>>, vector<8x1xf32>,
      %cst_44 = arith.constant 0.000000e+00 : f32
      %65 = vector.broadcast %cst_44 : f32 to vector<8x1xf32>
      %c0_45 = arith.constant 0 : index
      %c0_46 = arith.constant 0 : index
      %66 = vector.load %arg11[%c0_45, %c0_46] : memref<8x1xf32, #tpu.memory_space<vmem>>, vector<8x1xf32>
      tpu.vector_store %arg11[%c0_45, %c0_46], %65 {strides = array<i32>} : memref<8x1xf32, #tpu.memory_space<vmem>>, vector<8x1xf32>,
      %cst_47 = arith.constant 0.000000e+00 : f32
      %67 = vector.broadcast %cst_47 : f32 to vector<8x1xf32>
      %c0_48 = arith.constant 0 : index
      %c0_49 = arith.constant 0 : index
      %68 = vector.load %arg12[%c0_48, %c0_49] : memref<8x1xf32, #tpu.memory_space<vmem>>, vector<8x1xf32>
      tpu.vector_store %arg12[%c0_48, %c0_49], %67 {strides = array<i32>} : memref<8x1xf32, #tpu.memory_space<vmem>>, vector<8x1xf32>,
      %cst_50 = arith.constant 0.000000e+00 : f32
      %69 = vector.broadcast %cst_50 : f32 to vector<8x1xf32>
      %c0_51 = arith.constant 0 : index
      %c0_52 = arith.constant 0 : index
      %70 = vector.load %arg13[%c0_51, %c0_52] : memref<8x1xf32, #tpu.memory_space<vmem>>, vector<8x1xf32>
      tpu.vector_store %arg13[%c0_51, %c0_52], %69 {strides = array<i32>} : memref<8x1xf32, #tpu.memory_space<vmem>>, vector<8x1xf32>,
    } else {
    }
    %c0 = arith.constant 0 : index
    %c0_1 = arith.constant 0 : index
    %3 = vector.load %arg5[%c0, %c0_1] : memref<8x1xi32, #tpu.memory_space<vmem>>, vector<8x1xi32>
    %c512_i32 = arith.constant 512 : i32
    %4 = arith.muli %arg1, %c512_i32 : i32
    %5 = tpu.iota {dimensions = array<i32: 1>} : vector<8x512xi32>
    %6 = vector.broadcast %4 : i32 to vector<8x512xi32>
    %7 = arith.addi %6, %5 : vector<8x512xi32>
    %8 = vector.broadcast %3 : vector<8x1xi32> to vector<8x512xi32>
    %9 = arith.cmpi eq, %8, %7 : vector<8x512xi32>
    %10 = arith.extui %9 : vector<8x512xi1> to vector<8x512xi32>
    %11 = arith.sitofp %10 : vector<8x512xi32> to vector<8x512xf32>
    %c0_2 = arith.constant 0 : index
    %c0_3 = arith.constant 0 : index
    %12 = vector.load %arg2[%c0_2, %c0_3] : memref<8x128xbf16, #tpu.memory_space<vmem>>, vector<8x128xbf16>
    %c0_4 = arith.constant 0 : index
    %c0_5 = arith.constant 0 : index
    %13 = vector.load %arg7[%c0_4, %c0_5] : memref<128x512xbf16, #tpu.memory_space<vmem>>, vector<128x512xbf16>
    %cst = arith.constant dense<0.000000e+00> : vector<8x512xf32>
    %14 = tpu.matmul %12, %13, %cst {dimension_numbers = #tpu.dot_dimension_numbers<[1], [0], [0], [1], [0, 0, 1, 1], [], []>} : vector<8x128xbf16>, vector<128x512xbf16>, vector<8x512xf32> -> vector<8x512xf32>
    %c0_6 = arith.constant 0 : index
    %c0_7 = arith.constant 0 : index
    %15 = vector.load %arg3[%c0_6, %c0_7] : memref<8x1xf32, #tpu.memory_space<vmem>>, vector<8x1xf32>
    %c0_8 = arith.constant 0 : index
    %c0_9 = arith.constant 0 : index
    %16 = vector.load %arg6[%c0_8, %c0_9] : memref<1x512xf32, #tpu.memory_space<vmem>>, vector<1x512xf32>
    %17 = vector.broadcast %15 : vector<8x1xf32> to vector<8x512xf32>
    %18 = vector.broadcast %16 : vector<1x512xf32> to vector<8x512xf32>
    %19 = arith.addf %17, %18 : vector<8x512xf32>
    %cst_10 = arith.constant 2.000000e+00 : f32
    %20 = vector.broadcast %cst_10 : f32 to vector<8x512xf32>
    %21 = arith.mulf %20, %14 : vector<8x512xf32>
    %22 = arith.subf %19, %21 : vector<8x512xf32>
    %c0_11 = arith.constant 0 : index
    %c0_12 = arith.constant 0 : index
    %23 = vector.load %arg13[%c0_11, %c0_12] : memref<8x1xf32, #tpu.memory_space<vmem>>, vector<8x1xf32>
    %24 = arith.mulf %22, %11 : vector<8x512xf32>
    %cst_13 = arith.constant 9.99999996E-13 : f32
    %cst_14 = arith.constant 9.99999995E+11 : f32
    %25 = vector.broadcast %cst_13 : f32 to vector<8x512xf32>
    %26 = arith.maximumf %25, %24 : vector<8x512xf32>
    %27 = vector.broadcast %cst_14 : f32 to vector<8x512xf32>
    %28 = arith.minimumf %27, %26 : vector<8x512xf32>
    %cst_15 = arith.constant dense<0.000000e+00> : vector<8xf32>
    %29 = vector.multi_reduction <add>, %28, %cst_15 [1] : vector<8x512xf32> to vector<8xf32>
    %30 = vector.shape_cast %29 : vector<8xf32> to vector<8x1xf32>
    %31 = arith.addf %23, %30 : vector<8x1xf32>
    %c0_16 = arith.constant 0 : index
    %c0_17 = arith.constant 0 : index
    %32 = vector.load %arg13[%c0_16, %c0_17] : memref<8x1xf32, #tpu.memory_space<vmem>>, vector<8x1xf32>
    tpu.vector_store %arg13[%c0_16, %c0_17], %31 {strides = array<i32>} : memref<8x1xf32, #tpu.memory_space<vmem>>, vector<8x1xf32>,
    %c0_18 = arith.constant 0 : index
    %c0_19 = arith.constant 0 : index
    %33 = vector.load %arg4[%c0_18, %c0_19] : memref<8x512xf32, #tpu.memory_space<vmem>>, vector<8x512xf32>
    %cst_20 = arith.constant 5.000000e-01 : f32
    %34 = vector.broadcast %cst_20 : f32 to vector<8x512xf32>
    %35 = arith.mulf %33, %34 : vector<8x512xf32>
    %cst_21 = arith.constant dense<0xFF800000> : vector<8xf32>
    %36 = vector.multi_reduction <maximumf>, %35, %cst_21 [1] : vector<8x512xf32> to vector<8xf32>
    %37 = vector.shape_cast %36 : vector<8xf32> to vector<8x1xf32>
    %c0_22 = arith.constant 0 : index
    %c0_23 = arith.constant 0 : index
    %38 = vector.load %arg10[%c0_22, %c0_23] : memref<8x1xf32, #tpu.memory_space<vmem>>, vector<8x1xf32>
    %39 = arith.maximumf %38, %37 : vector<8x1xf32>
    %c0_24 = arith.constant 0 : index
    %c0_25 = arith.constant 0 : index
    %40 = vector.load %arg10[%c0_24, %c0_25] : memref<8x1xf32, #tpu.memory_space<vmem>>, vector<8x1xf32>
    %41 = arith.subf %40, %39 : vector<8x1xf32>
    %42 = math.exp %41 : vector<8x1xf32>
    %c0_26 = arith.constant 0 : index
    %c0_27 = arith.constant 0 : index
    %43 = vector.load %arg11[%c0_26, %c0_27] : memref<8x1xf32, #tpu.memory_space<vmem>>, vector<8x1xf32>
    %44 = arith.mulf %42, %43 : vector<8x1xf32>
    %45 = vector.broadcast %39 : vector<8x1xf32> to vector<8x512xf32>
    %46 = arith.subf %35, %45 : vector<8x512xf32>
    %47 = math.exp %46 : vector<8x512xf32>
    %cst_28 = arith.constant dense<0.000000e+00> : vector<8xf32>
    %48 = vector.multi_reduction <add>, %47, %cst_28 [1] : vector<8x512xf32> to vector<8xf32>
    %49 = vector.shape_cast %48 : vector<8xf32> to vector<8x1xf32>
    %50 = arith.addf %44, %49 : vector<8x1xf32>
    %c0_29 = arith.constant 0 : index
    %c0_30 = arith.constant 0 : index
    %51 = vector.load %arg11[%c0_29, %c0_30] : memref<8x1xf32, #tpu.memory_space<vmem>>, vector<8x1xf32>
    tpu.vector_store %arg11[%c0_29, %c0_30], %50 {strides = array<i32>} : memref<8x1xf32, #tpu.memory_space<vmem>>, vector<8x1xf32>,
    %c0_31 = arith.constant 0 : index
    %c0_32 = arith.constant 0 : index
    %52 = vector.load %arg10[%c0_31, %c0_32] : memref<8x1xf32, #tpu.memory_space<vmem>>, vector<8x1xf32>
    tpu.vector_store %arg10[%c0_31, %c0_32], %39 {strides = array<i32>} : memref<8x1xf32, #tpu.memory_space<vmem>>, vector<8x1xf32>,
    %c0_33 = arith.constant 0 : index
    %c0_34 = arith.constant 0 : index
    %53 = vector.load %arg12[%c0_33, %c0_34] : memref<8x1xf32, #tpu.memory_space<vmem>>, vector<8x1xf32>
    %cst_35 = arith.constant 0.000000e+00 : f32
    %54 = vector.broadcast %cst_35 : f32 to vector<8x512xf32>
    %55 = arith.select %9, %35, %54 : vector<8x512xi1>, vector<8x512xf32>
    %cst_36 = arith.constant dense<0.000000e+00> : vector<8xf32>
    %56 = vector.multi_reduction <add>, %55, %cst_36 [1] : vector<8x512xf32> to vector<8xf32>
    %57 = vector.shape_cast %56 : vector<8xf32> to vector<8x1xf32>
    %58 = arith.addf %53, %57 : vector<8x1xf32>
    %c0_37 = arith.constant 0 : index
    %c0_38 = arith.constant 0 : index
    %59 = vector.load %arg12[%c0_37, %c0_38] : memref<8x1xf32, #tpu.memory_space<vmem>>, vector<8x1xf32>
    tpu.vector_store %arg12[%c0_37, %c0_38], %58 {strides = array<i32>} : memref<8x1xf32, #tpu.memory_space<vmem>>, vector<8x1xf32>,
    %c0_i32_39 = arith.constant 0 : i32
    %60 = arith.cmpi eq, %arg1, %c0_i32_39 : i32
    %61 = arith.extui %60 : i1 to i32
    %c0_i32_40 = arith.constant 0 : i32
    %62 = arith.cmpi ne, %61, %c0_i32_40 : i32
    scf.if %62 {
      %c0_i32_41 = arith.constant 0 : i32
      %63 = vector.broadcast %c0_i32_41 : i32 to vector<8x1xi32>
      %64 = arith.cmpi sge, %3, %63 : vector<8x1xi32>
      %65 = arith.extui %64 : vector<8x1xi1> to vector<8x1xi32>
      %66 = arith.sitofp %65 : vector<8x1xi32> to vector<8x1xf32>
      %c0_42 = arith.constant 0 : index
      %c0_43 = arith.constant 0 : index
      %67 = vector.load %arg10[%c0_42, %c0_43] : memref<8x1xf32, #tpu.memory_space<vmem>>, vector<8x1xf32>
      %c0_44 = arith.constant 0 : index
      %c0_45 = arith.constant 0 : index
      %68 = vector.load %arg11[%c0_44, %c0_45] : memref<8x1xf32, #tpu.memory_space<vmem>>, vector<8x1xf32>
      %69 = math.log %68 : vector<8x1xf32>
      %70 = arith.addf %67, %69 : vector<8x1xf32>
      %c0_46 = arith.constant 0 : index
      %c0_47 = arith.constant 0 : index
      %71 = vector.load %arg12[%c0_46, %c0_47] : memref<8x1xf32, #tpu.memory_space<vmem>>, vector<8x1xf32>
      %72 = arith.subf %70, %71 : vector<8x1xf32>
      %73 = arith.mulf %72, %66 : vector<8x1xf32>
      %74 = vector.shape_cast %73 : vector<8x1xf32> to vector<1x8x1xf32>
      %cst_48 = arith.constant dense<0.000000e+00> : vector<1xf32>
      %75 = vector.multi_reduction <add>, %74, %cst_48 [1, 2] : vector<1x8x1xf32> to vector<1xf32>
      %76 = vector.shape_cast %75 : vector<1xf32> to vector<1x1x1xf32>
      %77 = vector.extract %76[0, 0, 0] : f32 from vector<1x1x1xf32>
      %cst_49 = arith.constant 6.250000e-02 : f32
      %78 = arith.mulf %77, %cst_49 : f32
      %c0_50 = arith.constant 0 : index
      %c0_51 = arith.constant 0 : index
      %79 = vector.load %arg13[%c0_50, %c0_51] : memref<8x1xf32, #tpu.memory_space<vmem>>, vector<8x1xf32>
      %80 = arith.mulf %79, %66 : vector<8x1xf32>
      %81 = vector.shape_cast %80 : vector<8x1xf32> to vector<1x8x1xf32>
      %cst_52 = arith.constant dense<0.000000e+00> : vector<1xf32>
      %82 = vector.multi_reduction <add>, %81, %cst_52 [1, 2] : vector<1x8x1xf32> to vector<1xf32>
      %83 = vector.shape_cast %82 : vector<1xf32> to vector<1x1x1xf32>
      %84 = vector.extract %83[0, 0, 0] : f32 from vector<1x1x1xf32>
      %cst_53 = arith.constant 6.250000e-02 : f32
      %85 = arith.mulf %84, %cst_53 : f32
      %86 = vector.broadcast %85 : f32 to vector<1x8x128xf32>
      %c0_54 = arith.constant 0 : index
      %c0_55 = arith.constant 0 : index
      %c0_56 = arith.constant 0 : index
      %87 = vector.load %arg8[%c0_54, %c0_55, %c0_56] : memref<1x8x128xf32, #tpu.memory_space<vmem>>, vector<1x8x128xf32>
      tpu.vector_store %arg8[%c0_54, %c0_55, %c0_56], %86 {strides = array<i32>} : memref<1x8x128xf32, #tpu.memory_space<vmem>>, vector<1x8x128xf32>,
      %88 = vector.broadcast %78 : f32 to vector<1x8x128xf32>
      %c0_57 = arith.constant 0 : index
      %c0_58 = arith.constant 0 : index
      %c0_59 = arith.constant 0 : index
      %89 = vector.load %arg9[%c0_57, %c0_58, %c0_59] : memref<1x8x128xf32, #tpu.memory_space<vmem>>, vector<1x8x128xf32>
      tpu.vector_store %arg9[%c0_57, %c0_58, %c0_59], %88 {strides = array<i32>} : memref<1x8x128xf32, #tpu.memory_space<vmem>>, vector<1x8x128xf32>,
    } else {
    }
    return
  }
  func.func @transform_0(%arg0: i32, %arg1: i32) -> (i32, i32) {
    %c0_i32 = arith.constant 0 : i32
    %c0_i32_0 = arith.constant 0 : i32
    return %arg0, %c0_i32 : i32, i32
  }
  func.func @transform_1(%arg0: i32, %arg1: i32) -> (i32, i32) {
    %c0_i32 = arith.constant 0 : i32
    %c0_i32_0 = arith.constant 0 : i32
    return %arg0, %c0_i32 : i32, i32
  }
  func.func @transform_2(%arg0: i32, %arg1: i32) -> (i32, i32) {
    %c0_i32 = arith.constant 0 : i32
    return %arg0, %arg1 : i32, i32
  }
  func.func @transform_3(%arg0: i32, %arg1: i32) -> (i32, i32) {
    %c0_i32 = arith.constant 0 : i32
    %c0_i32_0 = arith.constant 0 : i32
    return %arg0, %c0_i32 : i32, i32
  }
  func.func @transform_4(%arg0: i32, %arg1: i32) -> (i32, i32) {
    %c0_i32 = arith.constant 0 : i32
    %c0_i32_0 = arith.constant 0 : i32
    return %c0_i32, %arg1 : i32, i32
  }
  func.func @transform_5(%arg0: i32, %arg1: i32) -> (i32, i32) {
    %c0_i32 = arith.constant 0 : i32
    %c0_i32_0 = arith.constant 0 : i32
    return %c0_i32, %arg1 : i32, i32
  }
  func.func @transform_6(%arg0: i32, %arg1: i32) -> (i32, i32, i32) {
    %c0_i32 = arith.constant 0 : i32
    %c0_i32_0 = arith.constant 0 : i32
    %c0_i32_1 = arith.constant 0 : i32
    return %arg0, %c0_i32, %c0_i32_0 : i32, i32, i32
  }
  func.func @transform_7(%arg0: i32, %arg1: i32) -> (i32, i32, i32) {
    %c0_i32 = arith.constant 0 : i32
    %c0_i32_0 = arith.constant 0 : i32
    %c0_i32_1 = arith.constant 0 : i32
    return %arg0, %c0_i32, %c0_i32_0 : i32, i32, i32
  }
}

</mosaic_0001>

<llo_original>
// kernel: tpu_custom_call.1
$region0: #{tpu_custom_call.1}
  #allocation0 [shape = 'u32[]', space=smem, size = 0x4, offset = 0x4, fixed_abs, tag = 'smem constant byte address 0x4 - core index']
  #allocation1 [shape = 'u32[144,128]{1,0:T(1,128)}', space=vmem, size = 0x12000, scoped, tag = 'internal scratch']
  #allocation2 [shape = 'f32[8,1]{1,0:T(8,128)}', space=vmem, size = 0x1000, scoped, tag = 'scratch operand']
  #allocation3 [shape = 'f32[8,1]{1,0:T(8,128)}', space=vmem, size = 0x1000, scoped, tag = 'scratch operand']
  #allocation4 [shape = 'f32[8,1]{1,0:T(8,128)}', space=vmem, size = 0x1000, scoped, tag = 'scratch operand']
  #allocation5 [shape = 'f32[8,1]{1,0:T(8,128)}', space=vmem, size = 0x1000, scoped, tag = 'scratch operand']
  %s0 = inlined_call_operand.vmem [shape: bf16[16,128], index: 0, kind: input, shape index: {}]
  %s1 = inlined_call_operand.vmem [shape: f32[16,1], index: 1, kind: input, shape index: {}]
  %s2 = inlined_call_operand.hbm [shape: f32[16,512], index: 2, kind: input, shape index: {}]
  %s3 = inlined_call_operand.vmem [shape: s32[16,1], index: 3, kind: input, shape index: {}]
  %s4 = inlined_call_operand.vmem [shape: f32[1,512], index: 4, kind: input, shape index: {}]
  %s5 = inlined_call_operand.hbm [shape: bf16[128,512], index: 5, kind: input, shape index: {}]
  %s6 = inlined_call_operand.hbm [shape: f32[2,8,128], index: 6, kind: output, shape index: {0}]
  %s7 = inlined_call_operand.hbm [shape: f32[2,8,128], index: 7, kind: output, shape index: {1}]
  %8 = xla_tuple %s6, %s7
  %s9 = sld [smem:[#allocation0]]
  $region81: #{tpu_custom_call.1} parent=0
    _
  %s11 = ssub.s32 1, %s9
  %s12 = scalar_select 0, %s11, %s9
  $region1: #{tpu_custom_call.1} parent=0
    #allocation6 [shape = 'u8[32768]{0}', space=vmem, size = 0x8000, scoped, tag = 'input window, operand 2']
    #allocation7 [shape = 's32[2]{0}', space=sflag, size = 0x8, scoped, tag = 'scoped memory for tpu_custom_call.1']
    #allocation8 [shape = 's32[2]{0}', space=sflag, size = 0x8, scoped, tag = 'scoped memory for tpu_custom_call.1']
    #allocation9 [shape = 'u8[131072]{0}', space=vmem, size = 0x20000, scoped, tag = 'input window, operand 5, single buffered']
    #allocation10 [shape = 's32[1]{0}', space=sflag, size = 0x4, scoped, tag = 'scoped memory for tpu_custom_call.1']
    #allocation11 [shape = 'u8[8192]{0}', space=vmem, size = 0x2000, scoped, tag = 'output window, operand 0']
    #allocation12 [shape = 'u8[8192]{0}', space=vmem, size = 0x2000, scoped, tag = 'output window, operand 1']
    #allocation13 [shape = 's32[2]{0}', space=sflag, size = 0x8, scoped, tag = 'scoped memory for tpu_custom_call.1']
    %13 = vsyncpa [#allocation7], 0
    %s14 = scalar_lea.sflag [#allocation7], 1
    %15 = vsyncpa %s14, 0
    %16 = vsyncpa [#allocation10], 0
    %17 = vsyncpa [#allocation8], 0
    %s18 = scalar_lea.sflag [#allocation8], 1
    %19 = vsyncpa %s18, 0
    %20 = vsyncpa [#allocation13], 0
    %s21 = scalar_lea.sflag [#allocation13], 1
    %22 = vsyncpa %s21, 0
    loop: start=0, step=1, limit=4
    $region2: #{tpu_custom_call.1} parent=1 // loop_pre_header
      _
    $region3: #{tpu_custom_call.1} parent=1 // loop_header
      %s24 = sphi 0, %s28
      %p25 = scmp.ge.s32.totalorder %s24, 4
      %s31 = sphi 0, %s43
      %s32 = sphi 0, %s39
      %s33 = sphi 0, %s31
      %s34 = sphi 0, %s32
      %s35 = sphi 0, %s33
      %s36 = sphi 0, %s34
      %s46 = sphi 0, %s48
      %s49 = sphi 0, %s46
      %s50 = sphi 0, %s49
      %s66 = sphi 0, %s50
      %s72 = sphi 0, %s74
      %s75 = sphi 0, %s72
      %s76 = sphi 0, %s75
      %s92 = sphi 0, %s76
      %s100 = sphi 0, %s102
      %s103 = sphi 0, %s100
      %s104 = sphi 0, %s103
      %s120 = sphi 0, %s104
      %s126 = sphi 0, %s128
      %s129 = sphi 0, %s126
      %s130 = sphi 0, %s129
      %s146 = sphi 0, %s130
      %s152 = sphi 0, %s154
      %s155 = sphi 0, %s152
      %s156 = sphi 0, %s155
      %s172 = sphi 0, %s156
      %s178 = sphi 0, %s180
      %s181 = sphi 0, %s178
      %s182 = sphi 0, %s181
      %s198 = sphi 0, %s182
      %s204 = sphi 0, %s206
      %s207 = sphi 0, %s204
      %s208 = sphi 0, %s207
      %s224 = sphi 0, %s208
      %s230 = sphi 0, %s232
      %s233 = sphi 0, %s230
      %s234 = sphi 0, %s233
      %s250 = sphi 0, %s234
    $region4: #{tpu_custom_call.1} parent=1 // loop_header_branch
      %27 = sbr.rel (%p25) target = $region8
    $region5: #{tpu_custom_call.1} parent=1 // loop_body
      %s29 = ssub.s32 %s24, 1
      %s30 = ssub.s32 %s24, 2
      %s37 = sadd.s32 1, %s32
      %p38 = scmp.ge.s32.totalorder %s37, 1
      %s39 = scalar_select %p38, 0, %s37
      %s40 = sadd.s32 1, %s31
      %s41 = scalar_select %p38, %s40, %s31
      %p42 = scmp.ge.s32.totalorder %s41, 2
      %s43 = scalar_select %p42, 0, %s41
      %s44 = ssub.s32 %s31, %s43
      %p45 = scmp.eq.s32.totalorder %s44, 0
      %s47 = sadd.s32 %s46, 1
      %s48 = scalar_select %p45, %s46, %s47
      %p51 = pneg %p45
      %p52 = scmp.eq.s32.totalorder %s24, 1
      %p53 = por %p51, %p52
      %p54 = scmp.ne.s32.totalorder %s46, %s49
      %p55 = scmp.eq.s32.totalorder %s24, 0
      %p56 = por %p54, %p55
      %p57 = scmp.ne.s32.totalorder %s46, %s49
      %p58 = scmp.eq.s32.totalorder %s29, 1
      %p59 = por %p57, %p58
      %p60 = scmp.ne.s32.totalorder %s49, %s50
      %p61 = scmp.eq.s32.totalorder %s29, 0
      %p62 = por %p60, %p61
      %p63 = scmp.ne.s32.totalorder %s49, %s50
      %p64 = scmp.eq.s32.totalorder %s30, 1
      %p65 = por %p63, %p64
      %p67 = scmp.ne.s32.totalorder %s50, %s66
      %p68 = scmp.eq.s32.totalorder %s30, 0
      %p69 = por %p67, %p68
      %s70 = ssub.s32 %s31, %s43
      %p71 = scmp.eq.s32.totalorder %s70, 0
      %s73 = sadd.s32 %s72, 1
      %s74 = scalar_select %p71, %s72, %s73
      %p77 = pneg %p71
      %p78 = scmp.eq.s32.totalorder %s24, 1
      %p79 = por %p77, %p78
      %p80 = scmp.ne.s32.totalorder %s72, %s75
      %p81 = scmp.eq.s32.totalorder %s24, 0
      %p82 = por %p80, %p81
      %p83 = scmp.ne.s32.totalorder %s72, %s75
      %p84 = scmp.eq.s32.totalorder %s29, 1
      %p85 = por %p83, %p84
      %p86 = scmp.ne.s32.totalorder %s75, %s76
      %p87 = scmp.eq.s32.totalorder %s29, 0
      %p88 = por %p86, %p87
      %p89 = scmp.ne.s32.totalorder %s75, %s76
      %p90 = scmp.eq.s32.totalorder %s30, 1
      %p91 = por %p89, %p90
      %p93 = scmp.ne.s32.totalorder %s76, %s92
      %p94 = scmp.eq.s32.totalorder %s30, 0
      %p95 = por %p93, %p94
      %s96 = ssub.s32 %s31, %s43
      %s97 = ssub.s32 %s32, %s39
      %s98 = sor.u32 %s96, %s97
      %p99 = scmp.eq.s32.totalorder %s98, 0
      %s101 = sadd.s32 %s100, 1
      %s102 = scalar_select %p99, %s100, %s101
      %p105 = pneg %p99
      %p106 = scmp.eq.s32.totalorder %s24, 1
      %p107 = por %p105, %p106
      %p108 = scmp.ne.s32.totalorder %s100, %s103
      %p109 = scmp.eq.s32.totalorder %s24, 0
      %p110 = por %p108, %p109
      %p111 = scmp.ne.s32.totalorder %s100, %s103
      %p112 = scmp.eq.s32.totalorder %s29, 1
      %p113 = por %p111, %p112
      %p114 = scmp.ne.s32.totalorder %s103, %s104
      %p115 = scmp.eq.s32.totalorder %s29, 0
      %p116 = por %p114, %p115
      %p117 = scmp.ne.s32.totalorder %s103, %s104
      %p118 = scmp.eq.s32.totalorder %s30, 1
      %p119 = por %p117, %p118
      %p121 = scmp.ne.s32.totalorder %s104, %s120
      %p122 = scmp.eq.s32.totalorder %s30, 0
      %p123 = por %p121, %p122
      %s124 = ssub.s32 %s31, %s43
      %p125 = scmp.eq.s32.totalorder %s124, 0
      %s127 = sadd.s32 %s126, 1
      %s128 = scalar_select %p125, %s126, %s127
      %p131 = pneg %p125
      %p132 = scmp.eq.s32.totalorder %s24, 1
      %p133 = por %p131, %p132
      %p134 = scmp.ne.s32.totalorder %s126, %s129
      %p135 = scmp.eq.s32.totalorder %s24, 0
      %p136 = por %p134, %p135
      %p137 = scmp.ne.s32.totalorder %s126, %s129
      %p138 = scmp.eq.s32.totalorder %s29, 1
      %p139 = por %p137, %p138
      %p140 = scmp.ne.s32.totalorder %s129, %s130
      %p141 = scmp.eq.s32.totalorder %s29, 0
      %p142 = por %p140, %p141
      %p143 = scmp.ne.s32.totalorder %s129, %s130
      %p144 = scmp.eq.s32.totalorder %s30, 1
      %p145 = por %p143, %p144
      %p147 = scmp.ne.s32.totalorder %s130, %s146
      %p148 = scmp.eq.s32.totalorder %s30, 0
      %p149 = por %p147, %p148
      %s150 = ssub.s32 %s32, %s39
      %p151 = scmp.eq.s32.totalorder %s150, 0
      %s153 = sadd.s32 %s152, 1
      %s154 = scalar_select %p151, %s152, %s153
      %p157 = pneg %p151
      %p158 = scmp.eq.s32.totalorder %s24, 1
      %p159 = por %p157, %p158
      %p160 = scmp.ne.s32.totalorder %s152, %s155
      %p161 = scmp.eq.s32.totalorder %s24, 0
      %p162 = por %p160, %p161
      %p163 = scmp.ne.s32.totalorder %s152, %s155
      %p164 = scmp.eq.s32.totalorder %s29, 1
      %p165 = por %p163, %p164
      %p166 = scmp.ne.s32.totalorder %s155, %s156
      %p167 = scmp.eq.s32.totalorder %s29, 0
      %p168 = por %p166, %p167
      %p169 = scmp.ne.s32.totalorder %s155, %s156
      %p170 = scmp.eq.s32.totalorder %s30, 1
      %p171 = por %p169, %p170
      %p173 = scmp.ne.s32.totalorder %s156, %s172
      %p174 = scmp.eq.s32.totalorder %s30, 0
      %p175 = por %p173, %p174
      %s176 = ssub.s32 %s32, %s39
      %p177 = scmp.eq.s32.totalorder %s176, 0
      %s179 = sadd.s32 %s178, 1
      %s180 = scalar_select %p177, %s178, %s179
      %p183 = pneg %p177
      %p184 = scmp.eq.s32.totalorder %s24, 1
      %p185 = por %p183, %p184
      %p186 = scmp.ne.s32.totalorder %s178, %s181
      %p187 = scmp.eq.s32.totalorder %s24, 0
      %p188 = por %p186, %p187
      %p189 = scmp.ne.s32.totalorder %s178, %s181
      %p190 = scmp.eq.s32.totalorder %s29, 1
      %p191 = por %p189, %p190
      %p192 = scmp.ne.s32.totalorder %s181, %s182
      %p193 = scmp.eq.s32.totalorder %s29, 0
      %p194 = por %p192, %p193
      %p195 = scmp.ne.s32.totalorder %s181, %s182
      %p196 = scmp.eq.s32.totalorder %s30, 1
      %p197 = por %p195, %p196
      %p199 = scmp.ne.s32.totalorder %s182, %s198
      %p200 = scmp.eq.s32.totalorder %s30, 0
      %p201 = por %p199, %p200
      %s202 = ssub.s32 %s31, %s43
      %p203 = scmp.eq.s32.totalorder %s202, 0
      %s205 = sadd.s32 %s204, 1
      %s206 = scalar_select %p203, %s204, %s205
      %p209 = pneg %p203
      %p210 = scmp.eq.s32.totalorder %s24, 1
      %p211 = por %p209, %p210
      %p212 = scmp.ne.s32.totalorder %s204, %s207
      %p213 = scmp.eq.s32.totalorder %s24, 0
      %p214 = por %p212, %p213
      %p215 = scmp.ne.s32.totalorder %s204, %s207
      %p216 = scmp.eq.s32.totalorder %s29, 1
      %p217 = por %p215, %p216
      %p218 = scmp.ne.s32.totalorder %s207, %s208
      %p219 = scmp.eq.s32.totalorder %s29, 0
      %p220 = por %p218, %p219
      %p221 = scmp.ne.s32.totalorder %s207, %s208
      %p222 = scmp.eq.s32.totalorder %s30, 1
      %p223 = por %p221, %p222
      %p225 = scmp.ne.s32.totalorder %s208, %s224
      %p226 = scmp.eq.s32.totalorder %s30, 0
      %p227 = por %p225, %p226
      %s228 = ssub.s32 %s31, %s43
      %p229 = scmp.eq.s32.totalorder %s228, 0
      %s231 = sadd.s32 %s230, 1
      %s232 = scalar_select %p229, %s230, %s231
      %p235 = pneg %p229
      %p236 = scmp.eq.s32.totalorder %s24, 1
      %p237 = por %p235, %p236
      %p238 = scmp.ne.s32.totalorder %s230, %s233
      %p239 = scmp.eq.s32.totalorder %s24, 0
      %p240 = por %p238, %p239
      %p241 = scmp.ne.s32.totalorder %s230, %s233
      %p242 = scmp.eq.s32.totalorder %s29, 1
      %p243 = por %p241, %p242
      %p244 = scmp.ne.s32.totalorder %s233, %s234
      %p245 = scmp.eq.s32.totalorder %s29, 0
      %p246 = por %p244, %p245
      %p247 = scmp.ne.s32.totalorder %s233, %s234
      %p248 = scmp.eq.s32.totalorder %s30, 1
      %p249 = por %p247, %p248
      %p251 = scmp.ne.s32.totalorder %s234, %s250
      %p252 = scmp.eq.s32.totalorder %s30, 0
      %p253 = por %p251, %p252
      %p254 = scmp.le.s32.totalorder 1, %s24
      %p255 = scmp.lt.s32.totalorder %s24, 3
      %p256 = pnand %p254, %p255
      %p257 = pneg %p256
      // Predicated region
      $region9: #{tpu_custom_call.1} parent=5 // pred_check
        _
      $region10: #{tpu_custom_call.1} parent=5 // pred_check_branch
        %259 = sbr.rel (%p256) target = $region12
      $region11: #{tpu_custom_call.1} parent=5 // pred_region
        %s260 = ssub.s32 %s24, 1
        // Predicated region
        $region13: #{tpu_custom_call.1} parent=11 // pred_check
          %p261 = pneg %p168
        $region14: #{tpu_custom_call.1} parent=11 // pred_check_branch
          %263 = sbr.rel (%p261) target = $region16
        $region15: #{tpu_custom_call.1} parent=11 // pred_region
          %s264 = smul.u32 4, %s34
          %p265 = scmp.lt.s32.totalorder %s264, 3
          %s266 = scalar_select %p265, %s264, 3
          %s267 = scalar_lea.vmem %s4, %s266
          %s268 = smul.u32 4, %s34
        $region16: #{tpu_custom_call.1} parent=11 // pred_fallthru
          _
        // Predicated region
        $region17: #{tpu_custom_call.1} parent=11 // pred_check
          %p269 = pneg %p194
        $region18: #{tpu_custom_call.1} parent=11 // pred_check_branch
          %271 = sbr.rel (%p269) target = $region20
        $region19: #{tpu_custom_call.1} parent=11 // pred_region
          %s272 = smul.u32 4, %s34
          %s274 = ssub.s32 4096, 4096
          %275 = vsyncadd [#allocation10], %s274
          %s276 = smul.addr %s272, 64
          %s277 = scalar_lea.hbm %s5, %s276
          %s278 = sshll.u32 [#allocation9], 4
          %s279 = int_to_ptr.vmem [resolvable:$true] %s278
          %284 = dma.hbm_to_vmem [thread:$0]  %s277, 4096, %s279, [#allocation10], 256, 256, 16
        $region20: #{tpu_custom_call.1} parent=11 // pred_fallthru
          _
      $region12: #{tpu_custom_call.1} parent=5 // pred_fallthru
        _
      %p285 = scmp.lt.s32.totalorder %s24, 2
      // Predicated region
      $region21: #{tpu_custom_call.1} parent=5 // pred_check
        %p286 = pneg %p285
      $region22: #{tpu_custom_call.1} parent=5 // pred_check_branch
        %288 = sbr.rel (%p286) target = $region24
      $region23: #{tpu_custom_call.1} parent=5 // pred_region
        // Predicated region
        $region25: #{tpu_custom_call.1} parent=23 // pred_check
          %p289 = pneg %p56
        $region26: #{tpu_custom_call.1} parent=23 // pred_check_branch
          %291 = sbr.rel (%p289) target = $region28
        $region27: #{tpu_custom_call.1} parent=23 // pred_region
          %p292 = scmp.lt.s32.totalorder %s31, 1
          %s293 = scalar_select %p292, %s31, 1
          %s294 = smul.addr %s293, 4
          %s295 = scalar_lea.vmem %s0, %s294
        $region28: #{tpu_custom_call.1} parent=23 // pred_fallthru
          _
        // Predicated region
        $region29: #{tpu_custom_call.1} parent=23 // pred_check
          %p296 = pneg %p82
        $region30: #{tpu_custom_call.1} parent=23 // pred_check_branch
          %298 = sbr.rel (%p296) target = $region32
        $region31: #{tpu_custom_call.1} parent=23 // pred_region
          %p299 = scmp.lt.s32.totalorder %s31, 1
          %s300 = scalar_select %p299, %s31, 1
          %s301 = smul.addr %s300, 8
          %s302 = scalar_lea.vmem %s1, %s301
        $region32: #{tpu_custom_call.1} parent=23 // pred_fallthru
          _
        // Predicated region
        $region33: #{tpu_custom_call.1} parent=23 // pred_check
          %p303 = pneg %p110
        $region34: #{tpu_custom_call.1} parent=23 // pred_check_branch
          %305 = sbr.rel (%p303) target = $region36
        $region35: #{tpu_custom_call.1} parent=23 // pred_region
          %s306 = sand.u32 %s100, 1
          %s307 = scalar_lea.sflag [#allocation7], %s306
          %s308 = sand.u32 %s100, 1
          %s309 = smul.addr %s308, 32
          %s310 = scalar_lea.vmem [#allocation6], %s309
          %s311 = smul.u32 4, %s32
          %s313 = ssub.s32 512, 512
          %314 = vsyncadd %s307, %s313
          %s315 = smul.addr %s31, 4
          %s316 = sadd.s32 %s311, %s315
          %s317 = smul.addr %s316, 128
          %s318 = scalar_lea.hbm %s2, %s317
          %s320 = sshll.u32 %s310, 4
          %s321 = int_to_ptr.vmem [resolvable:$true] %s320
          %323 = dma.hbm_to_vmem [thread:$0]  %s318, 512, %s321, %s307
        $region36: #{tpu_custom_call.1} parent=23 // pred_fallthru
          _
        // Predicated region
        $region37: #{tpu_custom_call.1} parent=23 // pred_check
          %p324 = pneg %p136
        $region38: #{tpu_custom_call.1} parent=23 // pred_check_branch
          %326 = sbr.rel (%p324) target = $region40
        $region39: #{tpu_custom_call.1} parent=23 // pred_region
          %p327 = scmp.lt.s32.totalorder %s31, 1
          %s328 = scalar_select %p327, %s31, 1
          %s329 = smul.addr %s328, 8
          %s330 = scalar_lea.vmem %s3, %s329
        $region40: #{tpu_custom_call.1} parent=23 // pred_fallthru
          _
      $region24: #{tpu_custom_call.1} parent=5 // pred_fallthru
        _
      %p331 = scmp.le.s32.totalorder 1, %s24
      %p332 = scmp.lt.s32.totalorder %s24, 3
      %p333 = pnand %p331, %p332
      %p334 = pneg %p333
      // Predicated region
      $region41: #{tpu_custom_call.1} parent=5 // pred_check
        _
      $region42: #{tpu_custom_call.1} parent=5 // pred_check_branch
        %336 = sbr.rel (%p333) target = $region44
      $region43: #{tpu_custom_call.1} parent=5 // pred_region
        %s337 = ssub.s32 %s24, 1
        %s338 = sand.u32 %s103, 1
        %s339 = scalar_lea.sflag [#allocation7], %s338
        %s340 = sand.u32 %s103, 1
        %s341 = smul.addr %s340, 32
        %s342 = scalar_lea.vmem [#allocation6], %s341
        // Predicated region
        $region45: #{tpu_custom_call.1} parent=43 // pred_check
          %p343 = pneg %p116
        $region46: #{tpu_custom_call.1} parent=43 // pred_check_branch
          %345 = sbr.rel (%p343) target = $region48
        $region47: #{tpu_custom_call.1} parent=43 // pred_region
          %346 = dma.done %s339, 512
        $region48: #{tpu_custom_call.1} parent=43 // pred_fallthru
          _
        // Predicated region
        $region49: #{tpu_custom_call.1} parent=43 // pred_check
          %p347 = pneg %p194
        $region50: #{tpu_custom_call.1} parent=43 // pred_check_branch
          %349 = sbr.rel (%p347) target = $region52
        $region51: #{tpu_custom_call.1} parent=43 // pred_region
          %350 = dma.done [#allocation10], 4096
        $region52: #{tpu_custom_call.1} parent=43 // pred_fallthru
          _
        %p351 = scmp.lt.s32.totalorder %s33, 1
        %s352 = scalar_select %p351, %s33, 1
        %s353 = smul.addr %s352, 4
        %s354 = scalar_lea.vmem %s0, %s353
        %p355 = pneg %p62
        %p356 = pneg %p59
        %p357 = scmp.lt.s32.totalorder %s33, 1
        %s358 = scalar_select %p357, %s33, 1
        %s359 = smul.addr %s358, 8
        %s360 = scalar_lea.vmem %s1, %s359
        %p361 = pneg %p88
        %p362 = pneg %p85
        %s363 = sand.u32 %s103, 1
        %s364 = scalar_lea.sflag [#allocation7], %s363
        %s365 = sand.u32 %s103, 1
        %s366 = smul.addr %s365, 32
        %s367 = scalar_lea.vmem [#allocation6], %s366
        %p368 = pneg %p116
        %p369 = pneg %p113
        %p370 = scmp.lt.s32.totalorder %s33, 1
        %s371 = scalar_select %p370, %s33, 1
        %s372 = smul.addr %s371, 8
        %s373 = scalar_lea.vmem %s3, %s372
        %p374 = pneg %p142
        %p375 = pneg %p139
        %s376 = smul.u32 4, %s34
        %p377 = scmp.lt.s32.totalorder %s376, 3
        %s378 = scalar_select %p377, %s376, 3
        %s379 = scalar_lea.vmem %s4, %s378
        %p380 = pneg %p168
        %p381 = pneg %p165
        %p382 = pneg %p194
        %p383 = pneg %p191
        %p384 = pneg %p220
        %p385 = pneg %p217
        %s386 = sand.u32 %s207, 1
        %s387 = scalar_lea.sflag [#allocation8], %s386
        %s388 = sand.u32 %s207, 1
        %s389 = smul.addr %s388, 8
        %s390 = scalar_lea.vmem [#allocation11], %s389
        %p391 = pneg %p246
        %p392 = pneg %p243
        %s393 = sand.u32 %s233, 1
        %s394 = scalar_lea.sflag [#allocation13], %s393
        %s395 = sand.u32 %s233, 1
        %s396 = smul.addr %s395, 8
        %s397 = scalar_lea.vmem [#allocation12], %s396
        %p398 = scmp.lt.s32.totalorder %s33, 1
        %s399 = scalar_select %p398, %s33, 1
        %s400 = smul.addr %s399, 4
        %s401 = scalar_lea.vmem %s0, %s400
        %p402 = scmp.lt.s32.totalorder %s33, 1
        %s403 = scalar_select %p402, %s33, 1
        %s404 = smul.addr %s403, 8
        %s405 = scalar_lea.vmem %s1, %s404
        %s406 = smul.u32 4, %s34
        %p407 = scmp.lt.s32.totalorder %s33, 1
        %s408 = scalar_select %p407, %s33, 1
        %s409 = smul.addr %s408, 8
        %s410 = scalar_lea.vmem %s3, %s409
        %s411 = smul.u32 4, %s34
        %p412 = scmp.lt.s32.totalorder %s411, 3
        %s413 = scalar_select %p412, %s411, 3
        %s414 = scalar_lea.vmem %s4, %s413
        %s415 = smul.u32 4, %s34
        %s416 = smul.u32 4, %s34
        %p418 = scmp.eq.s32.totalorder %s34, 0
        // Predicated region
        $region53: #{tpu_custom_call.1} parent=43 // pred_check
          %p419 = pneg %p418
        $region54: #{tpu_custom_call.1} parent=43 // pred_check_branch
          %421 = sbr.rel (%p419) target = $region56
        $region55: #{tpu_custom_call.1} parent=43 // pred_region
          %vm422 = vcmask 7168
          %423 = vst.msk [vmem:[#allocation2] sm:$0xff] %vm422, -inf
          %424 = vst.msk [vmem:[#allocation3] sm:$0xff] %vm422, 0.0
          %425 = vst.msk [vmem:[#allocation4] sm:$0xff] %vm422, 0.0
          %426 = vst.msk [vmem:[#allocation5] sm:$0xff] %vm422, 0.0
        $region56: #{tpu_custom_call.1} parent=43 // pred_fallthru
          _
        %v427 = vld [vmem:[%s410] sm:$0xff]
        %s428 = smul.u32 %s34, 512
        %v429 = vlaneseq
        %v430 = vand.u32 %v429, 127
        %v431 = vadd.s32 %v430, 128
        %v432 = vadd.s32 %v430, 256
        %v433 = vadd.s32 %v430, 384
        %v434 = vstv %s428
        %v435 = vadd.s32 %v434, %v430
        %v436 = vadd.s32 %v434, %v431
        %v437 = vadd.s32 %v434, %v432
        %v438 = vadd.s32 %v434, %v433
        %439 = vset.pattern.permute.xlu0 0
        %440 = vperm.xlu0 %439, %v427
        %v441 = vpop.permute.xlu0 %440
        %vm442 = vcmp.eq.s32.totalorder %v441, %v435
        %vm443 = vcmp.eq.s32.totalorder %v441, %v436
        %vm444 = vcmp.eq.s32.totalorder %v441, %v437
        %vm445 = vcmp.eq.s32.totalorder %v441, %v438
        %v446 = vsel %vm442, 1, 0
        %v447 = vsel %vm443, 1, 0
        %v448 = vsel %vm444, 1, 0
        %v449 = vsel %vm445, 1, 0
        %v450 = vcvt.s32.f32 %v446
        %v451 = vcvt.s32.f32 %v447
        %v452 = vcvt.s32.f32 %v448
        %v453 = vcvt.s32.f32 %v449
        %v454 = vld [vmem:[%s401] sm:$0xf]
        %v455 = vld [vmem:[#allocation9] sm:$0xff]
        %v456 = vld [vmem:[#allocation9 + $0x8] sm:$0xff]
        %v457 = vld [vmem:[#allocation9 + $0x10] sm:$0xff]
        %v458 = vld [vmem:[#allocation9 + $0x18] sm:$0xff]
        %v459 = vld [vmem:[#allocation9 + $0x20] sm:$0xff]
        %v460 = vld [vmem:[#allocation9 + $0x28] sm:$0xff]
        %v461 = vld [vmem:[#allocation9 + $0x30] sm:$0xff]
        %v462 = vld [vmem:[#allocation9 + $0x38] sm:$0xff]
        %v463 = vld [vmem:[#allocation9 + $0x40] sm:$0xff]
        %v464 = vld [vmem:[#allocation9 + $0x48] sm:$0xff]
        %v465 = vld [vmem:[#allocation9 + $0x50] sm:$0xff]
        %v466 = vld [vmem:[#allocation9 + $0x58] sm:$0xff]
        %v467 = vld [vmem:[#allocation9 + $0x60] sm:$0xff]
        %v468 = vld [vmem:[#allocation9 + $0x68] sm:$0xff]
        %v469 = vld [vmem:[#allocation9 + $0x70] sm:$0xff]
        %v470 = vld [vmem:[#allocation9 + $0x78] sm:$0xff]
        %v471 = vld [vmem:[#allocation9 + $0x80] sm:$0xff]
        %v472 = vld [vmem:[#allocation9 + $0x88] sm:$0xff]
        %v473 = vld [vmem:[#allocation9 + $0x90] sm:$0xff]
        %v474 = vld [vmem:[#allocation9 + $0x98] sm:$0xff]
        %v475 = vld [vmem:[#allocation9 + $0xa0] sm:$0xff]
        %v476 = vld [vmem:[#allocation9 + $0xa8] sm:$0xff]
        %v477 = vld [vmem:[#allocation9 + $0xb0] sm:$0xff]
        %v478 = vld [vmem:[#allocation9 + $0xb8] sm:$0xff]
        %v479 = vld [vmem:[#allocation9 + $0xc0] sm:$0xff]
        %v480 = vld [vmem:[#allocation9 + $0xc8] sm:$0xff]
        %v481 = vld [vmem:[#allocation9 + $0xd0] sm:$0xff]
        %v482 = vld [vmem:[#allocation9 + $0xd8] sm:$0xff]
        %v483 = vld [vmem:[#allocation9 + $0xe0] sm:$0xff]
        %v484 = vld [vmem:[#allocation9 + $0xe8] sm:$0xff]
        %v485 = vld [vmem:[#allocation9 + $0xf0] sm:$0xff]
        %v486 = vld [vmem:[#allocation9 + $0xf8] sm:$0xff]
        %v519 = vunpack.c.l.b16 %v455
        %v520 = vunpack.c.h.b16 %v455
        %v521 = vunpack.c.l.b16 %v456
        %v522 = vunpack.c.h.b16 %v456
        %v523 = vunpack.c.l.b16 %v457
        %v524 = vunpack.c.h.b16 %v457
        %v525 = vunpack.c.l.b16 %v458
        %v526 = vunpack.c.h.b16 %v458
        %v527 = vunpack.c.l.b16 %v459
        %v528 = vunpack.c.h.b16 %v459
        %v529 = vunpack.c.l.b16 %v460
        %v530 = vunpack.c.h.b16 %v460
        %v531 = vunpack.c.l.b16 %v461
        %v532 = vunpack.c.h.b16 %v461
        %v533 = vunpack.c.l.b16 %v462
        %v534 = vunpack.c.h.b16 %v462
        %v535 = vunpack.c.l.b16 %v463
        %v536 = vunpack.c.h.b16 %v463
        %v537 = vunpack.c.l.b16 %v464
        %v538 = vunpack.c.h.b16 %v464
        %v539 = vunpack.c.l.b16 %v465
        %v540 = vunpack.c.h.b16 %v465
        %v541 = vunpack.c.l.b16 %v466
        %v542 = vunpack.c.h.b16 %v466
        %v543 = vunpack.c.l.b16 %v467
        %v544 = vunpack.c.h.b16 %v467
        %v545 = vunpack.c.l.b16 %v468
        %v546 = vunpack.c.h.b16 %v468
        %v547 = vunpack.c.l.b16 %v469
        %v548 = vunpack.c.h.b16 %v469
        %v549 = vunpack.c.l.b16 %v470
        %v550 = vunpack.c.h.b16 %v470
        %v551 = vunpack.c.l.b16 %v471
        %v552 = vunpack.c.h.b16 %v471
        %v553 = vunpack.c.l.b16 %v472
        %v554 = vunpack.c.h.b16 %v472
        %v555 = vunpack.c.l.b16 %v473
        %v556 = vunpack.c.h.b16 %v473
        %v557 = vunpack.c.l.b16 %v474
        %v558 = vunpack.c.h.b16 %v474
        %v559 = vunpack.c.l.b16 %v475
        %v560 = vunpack.c.h.b16 %v475
        %v561 = vunpack.c.l.b16 %v476
        %v562 = vunpack.c.h.b16 %v476
        %v563 = vunpack.c.l.b16 %v477
        %v564 = vunpack.c.h.b16 %v477
        %v565 = vunpack.c.l.b16 %v478
        %v566 = vunpack.c.h.b16 %v478
        %v567 = vunpack.c.l.b16 %v479
        %v568 = vunpack.c.h.b16 %v479
        %v569 = vunpack.c.l.b16 %v480
        %v570 = vunpack.c.h.b16 %v480
        %v571 = vunpack.c.l.b16 %v481
        %v572 = vunpack.c.h.b16 %v481
        %v573 = vunpack.c.l.b16 %v482
        %v574 = vunpack.c.h.b16 %v482
        %v575 = vunpack.c.l.b16 %v483
        %v576 = vunpack.c.h.b16 %v483
        %v577 = vunpack.c.l.b16 %v484
        %v578 = vunpack.c.h.b16 %v484
        %v579 = vunpack.c.l.b16 %v485
        %v580 = vunpack.c.h.b16 %v485
        %v581 = vunpack.c.l.b16 %v486
        %v582 = vunpack.c.h.b16 %v486
        %v583 = vpack.c.b16 %v523, %v519
        %v584 = vpack.c.b16 %v524, %v520
        %v585 = vpack.c.b16 %v525, %v521
        %v586 = vpack.c.b16 %v526, %v522
        %v587 = vpack.c.b16 %v531, %v527
        %v588 = vpack.c.b16 %v532, %v528
        %v589 = vpack.c.b16 %v533, %v529
        %v590 = vpack.c.b16 %v534, %v530
        %v591 = vpack.c.b16 %v539, %v535
        %v592 = vpack.c.b16 %v540, %v536
        %v593 = vpack.c.b16 %v541, %v537
        %v594 = vpack.c.b16 %v542, %v538
        %v595 = vpack.c.b16 %v547, %v543
        %v596 = vpack.c.b16 %v548, %v544
        %v597 = vpack.c.b16 %v549, %v545
        %v598 = vpack.c.b16 %v550, %v546
        %v599 = vpack.c.b16 %v555, %v551
        %v600 = vpack.c.b16 %v556, %v552
        %v601 = vpack.c.b16 %v557, %v553
        %v602 = vpack.c.b16 %v558, %v554
        %v603 = vpack.c.b16 %v563, %v559
        %v604 = vpack.c.b16 %v564, %v560
        %v605 = vpack.c.b16 %v565, %v561
        %v606 = vpack.c.b16 %v566, %v562
        %v607 = vpack.c.b16 %v571, %v567
        %v608 = vpack.c.b16 %v572, %v568
        %v609 = vpack.c.b16 %v573, %v569
        %v610 = vpack.c.b16 %v574, %v570
        %v611 = vpack.c.b16 %v579, %v575
        %v612 = vpack.c.b16 %v580, %v576
        %v613 = vpack.c.b16 %v581, %v577
        %v614 = vpack.c.b16 %v582, %v578
        %647 = vmatprep.subr.bf16.mxu0 %v584
        %648 = vmatpush1.bf16.msra.mxu0 %v583
        %649 = vmatprep.subr.bf16.mxu0 %v588
        %650 = vmatpush1.bf16.msra.mxu0 %v587
        %651 = vmatprep.subr.bf16.mxu0 %v592
        %652 = vmatpush1.bf16.msra.mxu0 %v591
        %653 = vmatprep.subr.bf16.mxu0 %v596
        %654 = vmatpush1.bf16.msra.mxu0 %v595
        %655 = vmatprep.subr.bf16.mxu0 %v600
        %656 = vmatpush1.bf16.msra.mxu0 %v599
        %657 = vmatprep.subr.bf16.mxu0 %v604
        %658 = vmatpush1.bf16.msra.mxu0 %v603
        %659 = vmatprep.subr.bf16.mxu0 %v608
        %660 = vmatpush1.bf16.msra.mxu0 %v607
        %661 = vmatprep.subr.bf16.mxu0 %v612
        %662 = vmatpush1.bf16.msra.mxu0 %v611
        %663 = vmatprep.subr.bf16.mxu0 0
        %664 = vmatpush1.bf16.msra.mxu0 0
        %665 = vmatprep.subr.bf16.mxu0 0
        %666 = vmatpush1.bf16.msra.mxu0 0
        %667 = vmatprep.subr.bf16.mxu0 0
        %668 = vmatpush1.bf16.msra.mxu0 0
        %669 = vmatprep.subr.bf16.mxu0 0
        %670 = vmatpush1.bf16.msra.mxu0 0
        %671 = vmatprep.subr.bf16.mxu0 0
        %672 = vmatpush1.bf16.msra.mxu0 0
        %673 = vmatprep.subr.bf16.mxu0 0
        %674 = vmatpush1.bf16.msra.mxu0 0
        %675 = vmatprep.subr.bf16.mxu0 0
        %676 = vmatpush1.bf16.msra.mxu0 0
        %677 = vmatprep.subr.bf16.mxu0 0
        %678 = vmatpush1.bf16.msra.mxu0 0
        %679 = vmatprep.mubr.bf16.mxu0 0
        %680 = vmatmul.mubr.bf16.gmra.mrb[0].mxu0 %v454
        %v681 = vpop.f32.mrb[0].mxu0
        %v682 = vadd.f32 0.0, %v681
        %v683 = vpop.f32.mrb[0].mxu0
        %v684 = vadd.f32 0.0, %v683
        %v685 = vpop.f32.mrb[0].mxu0
        %v686 = vpop.f32.mrb[0].mxu0
        %687 = vdwg.mxu0
        %688 = vmatprep.subr.bf16.mxu0 %v586
        %689 = vmatpush1.bf16.msra.mxu0 %v585
        %690 = vmatprep.subr.bf16.mxu0 %v590
        %691 = vmatpush1.bf16.msra.mxu0 %v589
        %692 = vmatprep.subr.bf16.mxu0 %v594
        %693 = vmatpush1.bf16.msra.mxu0 %v593
        %694 = vmatprep.subr.bf16.mxu0 %v598
        %695 = vmatpush1.bf16.msra.mxu0 %v597
        %696 = vmatprep.subr.bf16.mxu0 %v602
        %697 = vmatpush1.bf16.msra.mxu0 %v601
        %698 = vmatprep.subr.bf16.mxu0 %v606
        %699 = vmatpush1.bf16.msra.mxu0 %v605
        %700 = vmatprep.subr.bf16.mxu0 %v610
        %701 = vmatpush1.bf16.msra.mxu0 %v609
        %702 = vmatprep.subr.bf16.mxu0 %v614
        %703 = vmatpush1.bf16.msra.mxu0 %v613
        %704 = vmatprep.subr.bf16.mxu0 0
        %705 = vmatpush1.bf16.msra.mxu0 0
        %706 = vmatprep.subr.bf16.mxu0 0
        %707 = vmatpush1.bf16.msra.mxu0 0
        %708 = vmatprep.subr.bf16.mxu0 0
        %709 = vmatpush1.bf16.msra.mxu0 0
        %710 = vmatprep.subr.bf16.mxu0 0
        %711 = vmatpush1.bf16.msra.mxu0 0
        %712 = vmatprep.subr.bf16.mxu0 0
        %713 = vmatpush1.bf16.msra.mxu0 0
        %714 = vmatprep.subr.bf16.mxu0 0
        %715 = vmatpush1.bf16.msra.mxu0 0
        %716 = vmatprep.subr.bf16.mxu0 0
        %717 = vmatpush1.bf16.msra.mxu0 0
        %718 = vmatprep.subr.bf16.mxu0 0
        %719 = vmatpush1.bf16.msra.mxu0 0
        %720 = vmatprep.mubr.bf16.mxu0 0
        %721 = vmatmul.mubr.bf16.gmra.mrb[0].mxu0 %v454
        %v722 = vpop.f32.mrb[0].mxu0
        %v723 = vadd.f32 0.0, %v722
        %v724 = vpop.f32.mrb[0].mxu0
        %v725 = vadd.f32 0.0, %v724
        %v726 = vpop.f32.mrb[0].mxu0
        %v727 = vpop.f32.mrb[0].mxu0
        %728 = vdwg.mxu0
        %v729 = vld [vmem:[%s405] sm:$0xff]
        %v730 = vld [vmem:[%s414] sm:$0xf]
        %732 = vset.pattern.permute.xlu0 0
        %733 = vperm.xlu0 %732, %v729
        %v734 = vpop.permute.xlu0 %733
        %v737 = vlaneseq
        %v738 = vshrl.u32 %v737, 7
        %v739 = vsub.s32 0, %v738
        %v740 = vrot.slane %v730, %v739
        %v741 = vlaneseq
        %v742 = vshrl.u32 %v741, 7
        %v743 = vsub.s32 1, %v742
        %v744 = vrot.slane %v730, %v743
        %v745 = vlaneseq
        %v746 = vshrl.u32 %v745, 7
        %v747 = vsub.s32 2, %v746
        %v748 = vrot.slane %v730, %v747
        %v749 = vlaneseq
        %v750 = vshrl.u32 %v749, 7
        %v751 = vsub.s32 3, %v750
        %v752 = vrot.slane %v730, %v751
        %v757 = vadd.f32 %v734, %v740
        %v758 = vadd.f32 %v734, %v744
        %v759 = vadd.f32 %v734, %v748
        %v760 = vadd.f32 %v734, %v752
        %v761 = vmul.f32 %v682, 2.0
        %v762 = vmul.f32 %v684, 2.0
        %v763 = vmul.f32 %v723, 2.0
        %v764 = vmul.f32 %v725, 2.0
        %v765 = vsub.f32 %v757, %v761
        %v766 = vsub.f32 %v758, %v762
        %v767 = vsub.f32 %v759, %v763
        %v768 = vsub.f32 %v760, %v764
        %v769 = vld [vmem:[#allocation5] sm:$0xff]
        %v770 = vmul.f32 %v765, %v450
        %v771 = vmul.f32 %v766, %v451
        %v772 = vmul.f32 %v767, %v452
        %v773 = vmul.f32 %v768, %v453
        %v774 = vmax.f32 %v770, 1e-12
        %v775 = vmax.f32 %v771, 1e-12
        %v776 = vmax.f32 %v772, 1e-12
        %v777 = vmax.f32 %v773, 1e-12
        %v778 = vmin.f32 %v774, 1e+12
        %v779 = vmin.f32 %v775, 1e+12
        %v780 = vmin.f32 %v776, 1e+12
        %v781 = vmin.f32 %v777, 1e+12
        %v782 = vadd.f32 %v778, %v779
        %v783 = vadd.f32 %v782, %v780
        %v784 = vadd.f32 %v783, %v781
        %785 = vadd.xlane.f32.xlu0 %v784
        %v786 = vpop.xlane.xlu0 %785
        %v787 = vadd.f32 %v769, %v786
        %vm788 = vcmask 7168
        %789 = vst.msk [vmem:[#allocation5] sm:$0xff] %vm788, %v787
        %v790 = vld [vmem:[%s342] sm:$0xff]
        %v791 = vld [vmem:[%s342 + $0x8] sm:$0xff]
        %v792 = vld [vmem:[%s342 + $0x10] sm:$0xff]
        %v793 = vld [vmem:[%s342 + $0x18] sm:$0xff]
        %v794 = vmul.f32 %v790, 0.5
        %v795 = vmul.f32 %v791, 0.5
        %v796 = vmul.f32 %v792, 0.5
        %v797 = vmul.f32 %v793, 0.5
        %v798 = vmax.f32 %v794, %v795
        %v799 = vmax.f32 %v796, %v797
        %v800 = vmax.f32 %v798, %v799
        %801 = vmax.xlane.f32.xlu0 %v800
        %v802 = vpop.xlane.xlu0 %801
        %v803 = vld [vmem:[#allocation2] sm:$0xff]
        %v804 = vmax.f32 %v803, %v802
        %v805 = vsub.f32 %v803, %v804
        %v806 = vmul.f32 %v805, 1.442695
        %v807 = vpow.pop %v806
        %v808 = vld [vmem:[#allocation3] sm:$0xff]
        %v809 = vmul.f32 %v807, %v808
        %811 = vset.pattern.permute.xlu0 0
        %812 = vperm.xlu0 %811, %v804
        %v813 = vpop.permute.xlu0 %812
        %v815 = vsub.f32 %v794, %v813
        %v816 = vsub.f32 %v795, %v813
        %v817 = vsub.f32 %v796, %v813
        %v818 = vsub.f32 %v797, %v813
        %v819 = vmul.f32 %v815, 1.442695
        %v820 = vpow.pop %v819
        %v821 = vmul.f32 %v816, 1.442695
        %v822 = vpow.pop %v821
        %v823 = vmul.f32 %v817, 1.442695
        %v824 = vpow.pop %v823
        %v825 = vmul.f32 %v818, 1.442695
        %v826 = vpow.pop %v825
        %v827 = vadd.f32 %v820, %v822
        %v828 = vadd.f32 %v827, %v824
        %v829 = vadd.f32 %v828, %v826
        %830 = vadd.xlane.f32.xlu0 %v829
        %v831 = vpop.xlane.xlu0 %830
        %v832 = vadd.f32 %v809, %v831
        %833 = vst.msk [vmem:[#allocation3] sm:$0xff] %vm788, %v832
        %834 = vst.msk [vmem:[#allocation2] sm:$0xff] %vm788, %v804
        %v835 = vld [vmem:[#allocation4] sm:$0xff]
        %v836 = vsel %vm442, %v794, 0.0
        %v837 = vsel %vm443, %v795, 0.0
        %v838 = vsel %vm444, %v796, 0.0
        %v839 = vsel %vm445, %v797, 0.0
        %v840 = vadd.f32 %v836, %v837
        %v841 = vadd.f32 %v840, %v838
        %v842 = vadd.f32 %v841, %v839
        %843 = vadd.xlane.f32.xlu0 %v842
        %v844 = vpop.xlane.xlu0 %843
        %v845 = vadd.f32 %v835, %v844
        %846 = vst.msk [vmem:[#allocation4] sm:$0xff] %vm788, %v845
        // Predicated region
        $region57: #{tpu_custom_call.1} parent=43 // pred_check
          %p847 = pneg %p418
        $region58: #{tpu_custom_call.1} parent=43 // pred_check_branch
          %849 = sbr.rel (%p847) target = $region60
        $region59: #{tpu_custom_call.1} parent=43 // pred_region
          %vm850 = vcmp.ge.s32.totalorder %v427, 0
          %v851 = vsel %vm850, 1, 0
          %v852 = vcvt.s32.f32 %v851
          %v853 = vld [vmem:[#allocation2] sm:$0xff]
          %v854 = vld [vmem:[#allocation3] sm:$0xff]
          %v855 = vlog2.pop %v854
          %v856 = vmul.f32 %v855, 0.6931472
          %v857 = vadd.f32 %v853, %v856
          %v858 = vld [vmem:[#allocation4] sm:$0xff]
          %v859 = vsub.f32 %v857, %v858
          %v860 = vmul.f32 %v859, %v852
          %v861 = vsel %vm788, %v860, 0.0
          %862 = vadd.xlane.f32.xlu0 %v861
          %v863 = vpop.xlane.xlu0 %862
          %v864 = vrot.slane %v863, 4
          %v865 = vadd.f32 %v863, %v864
          %v866 = vrot.slane %v865, 2
          %v867 = vadd.f32 %v865, %v866
          %v868 = vrot.slane %v867, 1
          %v869 = vadd.f32 %v867, %v868
          %s870 = vtos %v869
          %s871 = smul.f32 %s870, 0.0625
          %v872 = vld [vmem:[#allocation5] sm:$0xff]
          %v873 = vmul.f32 %v872, %v852
          %v874 = vsel %vm788, %v873, 0.0
          %875 = vadd.xlane.f32.xlu0 %v874
          %v876 = vpop.xlane.xlu0 %875
          %v877 = vrot.slane %v876, 4
          %v878 = vadd.f32 %v876, %v877
          %v879 = vrot.slane %v878, 2
          %v880 = vadd.f32 %v878, %v879
          %v881 = vrot.slane %v880, 1
          %v882 = vadd.f32 %v880, %v881
          %s883 = vtos %v882
          %s884 = smul.f32 %s883, 0.0625
          %v885 = vstv %s884
          %886 = vst [vmem:[%s390] sm:$0xff] %v885
          %v887 = vstv %s871
          %888 = vst [vmem:[%s397] sm:$0xff] %v887
        $region60: #{tpu_custom_call.1} parent=43 // pred_fallthru
          _
        %s889 = sand.u32 %s207, 1
        %s890 = scalar_lea.sflag [#allocation8], %s889
        %s891 = sand.u32 %s207, 1
        %s892 = smul.addr %s891, 8
        %s893 = scalar_lea.vmem [#allocation11], %s892
        %s894 = sand.u32 %s233, 1
        %s895 = scalar_lea.sflag [#allocation13], %s894
        %s896 = sand.u32 %s233, 1
        %s897 = smul.addr %s896, 8
        %s898 = scalar_lea.vmem [#allocation12], %s897
        // Predicated region
        $region61: #{tpu_custom_call.1} parent=43 // pred_check
          %p899 = pneg %p217
        $region62: #{tpu_custom_call.1} parent=43 // pred_check_branch
          %901 = sbr.rel (%p899) target = $region64
        $region63: #{tpu_custom_call.1} parent=43 // pred_region
          %s903 = ssub.s32 128, 128
          %904 = vsyncadd %s890, %s903
          %s905 = smul.addr %s33, 128
          %s906 = scalar_lea.hbm %s6, %s905
          %s908 = sshll.u32 %s893, 4
          %s909 = int_to_ptr.vmem [resolvable:$true] %s908
          %911 = dma.vmem_to_hbm [thread:$0]  %s909, 128, %s906, %s890
        $region64: #{tpu_custom_call.1} parent=43 // pred_fallthru
          _
        // Predicated region
        $region65: #{tpu_custom_call.1} parent=43 // pred_check
          %p912 = pneg %p243
        $region66: #{tpu_custom_call.1} parent=43 // pred_check_branch
          %914 = sbr.rel (%p912) target = $region68
        $region67: #{tpu_custom_call.1} parent=43 // pred_region
          %s916 = ssub.s32 128, 128
          %917 = vsyncadd %s895, %s916
          %s918 = smul.addr %s33, 128
          %s919 = scalar_lea.hbm %s7, %s918
          %s921 = sshll.u32 %s898, 4
          %s922 = int_to_ptr.vmem [resolvable:$true] %s921
          %924 = dma.vmem_to_hbm [thread:$0]  %s922, 128, %s919, %s895
        $region68: #{tpu_custom_call.1} parent=43 // pred_fallthru
          _
      $region44: #{tpu_custom_call.1} parent=5 // pred_fallthru
        _
      %p925 = scmp.le.s32.totalorder 2, %s24
      // Predicated region
      $region69: #{tpu_custom_call.1} parent=5 // pred_check
        %p926 = pneg %p925
      $region70: #{tpu_custom_call.1} parent=5 // pred_check_branch
        %928 = sbr.rel (%p926) target = $region72
      $region71: #{tpu_custom_call.1} parent=5 // pred_region
        %s929 = ssub.s32 %s24, 2
        // Predicated region
        $region73: #{tpu_custom_call.1} parent=71 // pred_check
          %p930 = pneg %p223
        $region74: #{tpu_custom_call.1} parent=71 // pred_check_branch
          %932 = sbr.rel (%p930) target = $region76
        $region75: #{tpu_custom_call.1} parent=71 // pred_region
          %s933 = sand.u32 %s208, 1
          %s934 = scalar_lea.sflag [#allocation8], %s933
          %s935 = sand.u32 %s208, 1
          %s936 = smul.addr %s935, 8
          %s937 = scalar_lea.vmem [#allocation11], %s936
          %938 = dma.done %s934, 128
        $region76: #{tpu_custom_call.1} parent=71 // pred_fallthru
          _
        // Predicated region
        $region77: #{tpu_custom_call.1} parent=71 // pred_check
          %p939 = pneg %p249
        $region78: #{tpu_custom_call.1} parent=71 // pred_check_branch
          %941 = sbr.rel (%p939) target = $region80
        $region79: #{tpu_custom_call.1} parent=71 // pred_region
          %s942 = sand.u32 %s234, 1
          %s943 = scalar_lea.sflag [#allocation13], %s942
          %s944 = sand.u32 %s234, 1
          %s945 = smul.addr %s944, 8
          %s946 = scalar_lea.vmem [#allocation12], %s945
          %947 = dma.done %s943, 128
        $region80: #{tpu_custom_call.1} parent=71 // pred_fallthru
          _
      $region72: #{tpu_custom_call.1} parent=5 // pred_fallthru
        _
    $region6: #{tpu_custom_call.1} parent=1 // loop_footer
      %s28 = sadd.s32 1, %s24
    $region7: #{tpu_custom_call.1} parent=1 // loop_footer_branch
      %23 = sbr.rel target = $region3
    $region8: #{tpu_custom_call.1} parent=1 // loop_exit
      _
    %948 = vsyncpa [#allocation7], 1
    %s949 = scalar_lea.sflag [#allocation7], 1
    %950 = vsyncpa %s949, 1
    %951 = vsyncpa [#allocation10], 1
    %952 = vsyncpa [#allocation8], 1
    %s953 = scalar_lea.sflag [#allocation8], 1
    %954 = vsyncpa %s953, 1
    %955 = vsyncpa [#allocation13], 1
    %s956 = scalar_lea.sflag [#allocation13], 1
    %957 = vsyncpa %s956, 1

</llo_original>
